<compile_context>
chip_gen: v5e
topology: v5e:2x2
jax: 0.10.0
libtpu: 0.0.40
codegen_flags: <defaults>
</compile_context>

<pallas_src>
import functools
import math

import jax
import jax.numpy as jnp
from jax import lax
from jax.experimental import pallas as pl
from jax.experimental.pallas import tpu as pltpu


def _round_up(x, m):
    return ((x + m - 1) // m) * m


def _upsampler_kernel(w_ref, b_ref, x_ref, o_ref, carry_ref, *, W):
    # w_ref:     (4, Cout_p, Cin_p)  effective 2x2 taps [w00, w01, w10, w11]
    # b_ref:     (Cout_p, 1)
    # x_ref:     (Cin_p, HWt)        HWt = R*W (row-aligned, lane-dense)
    # o_ref:     (Cout_p, HWt)
    # carry_ref: (Cout_p, W)         last "row term" row of the previous tile
    t = pl.program_id(1)

    @pl.when(t == 0)
    def _():
        # First tile of a new image: the row above is the zero top-pad.
        carry_ref[...] = jnp.zeros(carry_ref.shape, carry_ref.dtype)

    xv = x_ref[...]
    f32 = jnp.float32
    p00 = jnp.dot(w_ref[0], xv, preferred_element_type=f32)  # pairs x[h-1, w-1]
    p01 = jnp.dot(w_ref[1], xv, preferred_element_type=f32)  # pairs x[h-1, w  ]
    p10 = jnp.dot(w_ref[2], xv, preferred_element_type=f32)  # pairs x[h,   w-1]
    p11 = jnp.dot(w_ref[3], xv, preferred_element_type=f32)  # pairs x[h,   w  ]

    # Column shift (w -> w-1): roll by one lane, zero the w==0 column (left pad).
    # Tiles always start at a row boundary, so the roll's wrap lane is masked too.
    lane = lax.broadcasted_iota(jnp.int32, p00.shape, 1)
    not_w0 = (lane % W) != 0
    row_term = jnp.where(not_w0, pltpu.roll(p00, 1, axis=1), 0.0) + p01
    col_term = jnp.where(not_w0, pltpu.roll(p10, 1, axis=1), 0.0) + p11

    # Row shift (h -> h-1): roll by W lanes; the tile's first row is fixed up
    # below with the carry from the previous tile (or zeros for the top pad).
    rows_from_prev = pltpu.roll(row_term, W, axis=1)

    bias = b_ref[...]
    o_ref[...] = (col_term + rows_from_prev + bias).astype(o_ref.dtype)
    o_ref[:, :W] = (col_term[:, :W] + carry_ref[...] + bias).astype(o_ref.dtype)

    # Carry the last row's "row term" into the next tile of the same image.
    carry_ref[...] = row_term[:, row_term.shape[-1] - W:]


def upsampler_forward(x, weight, bias, *, vmem_budget_bytes=12 * 1024 * 1024):
    """UpSampler forward: nearest x2 upsample then Conv2d(3x3, stride=2, pad=1).

    x:      (N, Cin, H, W)   NCHW (PyTorch convention)
    weight: (Cout, Cin, 3, 3)
    bias:   (Cout,)
    returns (N, Cout, H, W)
    """
    N, Cin, H, W = x.shape
    Cout = weight.shape[0]
    assert weight.shape == (Cout, Cin, 3, 3)
    assert x.shape[1] == Cin  # mirrors the module's channel assert

    # 8-sublane minimum padding only (f32); do NOT pad toward the MXU dim.
    Cin_p = _round_up(Cin, 8)
    Cout_p = _round_up(Cout, 8)

    # ---- fold the 3x3 stride-2 conv over the 2x upsample into an effective
    #      2x2 stride-1 conv over the original image ----
    w00 = weight[:, :, 0, 0]
    w01 = weight[:, :, 0, 1] + weight[:, :, 0, 2]
    w10 = weight[:, :, 1, 0] + weight[:, :, 2, 0]
    w11 = weight[:, :, 1:, 1:].sum(axis=(2, 3))
    w_eff = jnp.stack([w00, w01, w10, w11], axis=0)                  # (4, Cout, Cin)
    w_eff = jnp.pad(w_eff, ((0, 0), (0, Cout_p - Cout), (0, Cin_p - Cin)))
    w_eff = w_eff.astype(x.dtype)
    b_p = jnp.pad(bias.astype(jnp.float32), (0, Cout_p - Cout)).reshape(Cout_p, 1)

    # ---- tile the flattened spatial axis from a VMEM byte budget ----
    # Per lane column: double-buffered x/out pipeline blocks + worst-case
    # in-kernel f32 temporaries.
    itemsize = 4
    bytes_per_lane = itemsize * (3 * Cin_p + 8 * Cout_p)
    quantum = (W * 128) // math.gcd(W, 128)          # lcm(W, 128): row & lane aligned
    cap = max(quantum, (vmem_budget_bytes // bytes_per_lane) // quantum * quantum)
    HW = H * W
    if HW <= cap:
        nt, Hp, HWt = 1, H, HW                       # whole image in one tile
    else:
        R = cap // W                                 # rows per tile; R*W % 128 == 0
        nt = pl.cdiv(H, R)
        Hp, HWt = nt * R, R * W

    # ---- single 1x activation read: (N, Cin_p, Hp*W), HW flattened on lanes ----
    if Cin_p != Cin or Hp != H:
        x_in = jnp.pad(x, ((0, 0), (0, Cin_p - Cin), (0, Hp - H), (0, 0)))
    else:
        x_in = x
    x_in = x_in.reshape(N, Cin_p, Hp * W)

    flops = 2 * N * Cout_p * Cin_p * 4 * Hp * W
    bytes_accessed = ((x_in.size + N * Cout_p * Hp * W) * x.dtype.itemsize
                      + w_eff.size * w_eff.dtype.itemsize + b_p.size * 4)

    out = pl.pallas_call(
        functools.partial(_upsampler_kernel, W=W),
        out_shape=jax.ShapeDtypeStruct((N, Cout_p, Hp * W), x.dtype),
        grid_spec=pltpu.PrefetchScalarGridSpec(
            num_scalar_prefetch=0,
            grid=(N, nt),
            in_specs=[
                pl.BlockSpec((4, Cout_p, Cin_p), lambda n, t: (0, 0, 0)),
                pl.BlockSpec((Cout_p, 1), lambda n, t: (0, 0)),
                pl.BlockSpec((None, Cin_p, HWt), lambda n, t: (n, 0, t)),
            ],
            out_specs=pl.BlockSpec((None, Cout_p, HWt), lambda n, t: (n, 0, t)),
            scratch_shapes=[pltpu.VMEM((Cout_p, W), jnp.float32)],
        ),
        compiler_params=pltpu.CompilerParams(
            dimension_semantics=("parallel", "arbitrary"),
            vmem_limit_bytes=32 * 1024 * 1024),
        cost_estimate=pl.CostEstimate(
            flops=flops, transcendentals=0, bytes_accessed=bytes_accessed),
    )(w_eff, b_p, x_in)

    # Already channel-major: slice off padding and restore NCHW spatial dims.
    return out[:, :Cout, :HW].reshape(N, Cout, H, W)


def _reference_forward(x, weight, bias):
    """Pure-JAX reference: nearest x2 upsample + lax conv (NCHW)."""
    xu = jnp.repeat(jnp.repeat(x, 2, axis=2), 2, axis=3)
    y = lax.conv_general_dilated(
        xu, weight, window_strides=(2, 2), padding=((1, 1), (1, 1)),
        dimension_numbers=("NCHW", "OIHW", "NCHW"))
    return y + bias[None, :, None, None]


if __name__ == "__main__":
    N, Cin, Cout, H, W = 2, 4, 8, 16, 16

    key = jax.random.PRNGKey(0)
    kx, kw, kb = jax.random.split(key, 3)

    x = jax.random.normal(kx, (N, Cin, H, W), dtype=jnp.float32)
    # Deterministic parameter init (PyTorch-like uniform fan-in scaling).
    fan_in = Cin * 3 * 3
    bound = 1.0 / (fan_in ** 0.5)
    weight = jax.random.uniform(kw, (Cout, Cin, 3, 3), dtype=jnp.float32,
                                minval=-bound, maxval=bound)
    bias = jax.random.uniform(kb, (Cout,), dtype=jnp.float32,
                              minval=-bound, maxval=bound)

    y_ref = jax.block_until_ready(_reference_forward(x, weight, bias))

    # Single-tile path (whole 16x16 image in one lane-dense tile).
    y = jax.block_until_ready(upsampler_forward(x, weight, bias))
    assert y.shape == (N, Cout, H, W), y.shape
    assert jnp.allclose(y, y_ref, atol=1e-4, rtol=1e-4), \
        float(jnp.max(jnp.abs(y - y_ref)))

    # Multi-tile path: a tiny budget forces HW tiling and exercises the
    # cross-tile row carry (sequential t axis).
    y2 = jax.block_until_ready(
        upsampler_forward(x, weight, bias, vmem_budget_bytes=1))
    assert jnp.allclose(y2, y_ref, atol=1e-4, rtol=1e-4), \
        float(jnp.max(jnp.abs(y2 - y_ref)))

    print("KERNEL_OK")
</pallas_src>

<mosaic_0001>
module attributes {stable_mosaic.version = 11 : i64} {
  func.func @_upsampler_kernel(%arg0: i32, %arg1: i32, %arg2: memref<4x8x8xf32, #tpu.memory_space<vmem>>, %arg3: memref<8x1xf32, #tpu.memory_space<vmem>>, %arg4: memref<1x8x256xf32, #tpu.memory_space<vmem>>, %arg5: memref<1x8x256xf32, #tpu.memory_space<vmem>>, %arg6: memref<8x16xf32, #tpu.memory_space<vmem>>) attributes {dimension_semantics = [#tpu.dimension_semantics<parallel>, #tpu.dimension_semantics<arbitrary>], iteration_bounds = array<i64: 2, 1>, scalar_prefetch = 0 : i64, scratch_operands = 1 : i64, tpu.core_type = #tpu.core_type<tc>, window_params = [{pipeline_mode = #tpu.pipeline_mode<synchronous>, transform_indices = @transform_0, window_bounds = array<i64: 4, 8, 8>}, {pipeline_mode = #tpu.pipeline_mode<synchronous>, transform_indices = @transform_1, window_bounds = array<i64: 8, 1>}, {transform_indices = @transform_2, window_bounds = array<i64: 1, 8, 256>}, {transform_indices = @transform_3, window_bounds = array<i64: 1, 8, 256>}]} {
    %c0_i32 = arith.constant 0 : i32
    %0 = arith.cmpi eq, %arg1, %c0_i32 : i32
    %1 = arith.extui %0 : i1 to i32
    %c0_i32_0 = arith.constant 0 : i32
    %2 = arith.cmpi ne, %1, %c0_i32_0 : i32
    scf.if %2 {
      %cst_37 = arith.constant 0.000000e+00 : f32
      %62 = vector.broadcast %cst_37 : f32 to vector<8x16xf32>
      %c0_38 = arith.constant 0 : index
      %c0_39 = arith.constant 0 : index
      %63 = vector.load %arg6[%c0_38, %c0_39] : memref<8x16xf32, #tpu.memory_space<vmem>>, vector<8x16xf32>
      tpu.vector_store %arg6[%c0_38, %c0_39], %62 {strides = array<i32>} : memref<8x16xf32, #tpu.memory_space<vmem>>, vector<8x16xf32>,
    } else {
    }
    %c0 = arith.constant 0 : index
    %c0_1 = arith.constant 0 : index
    %c0_2 = arith.constant 0 : index
    %3 = vector.load %arg4[%c0, %c0_1, %c0_2] : memref<1x8x256xf32, #tpu.memory_space<vmem>>, vector<1x8x256xf32>
    %4 = vector.shape_cast %3 : vector<1x8x256xf32> to vector<8x256xf32>
    %c0_3 = arith.constant 0 : index
    %c0_4 = arith.constant 0 : index
    %c0_5 = arith.constant 0 : index
    %5 = vector.load %arg2[%c0_3, %c0_4, %c0_5] : memref<4x8x8xf32, #tpu.memory_space<vmem>>, vector<1x8x8xf32>
    %6 = vector.shape_cast %5 : vector<1x8x8xf32> to vector<8x8xf32>
    %cst = arith.constant dense<0.000000e+00> : vector<8x256xf32>
    %7 = tpu.matmul %6, %4, %cst {dimension_numbers = #tpu.dot_dimension_numbers<[1], [0], [0], [1], [0, 0, 1, 1], [], []>} : vector<8x8xf32>, vector<8x256xf32>, vector<8x256xf32> -> vector<8x256xf32>
    %c1 = arith.constant 1 : index
    %c0_6 = arith.constant 0 : index
    %c0_7 = arith.constant 0 : index
    %8 = vector.load %arg2[%c1, %c0_6, %c0_7] : memref<4x8x8xf32, #tpu.memory_space<vmem>>, vector<1x8x8xf32>
    %9 = vector.shape_cast %8 : vector<1x8x8xf32> to vector<8x8xf32>
    %cst_8 = arith.constant dense<0.000000e+00> : vector<8x256xf32>
    %10 = tpu.matmul %9, %4, %cst_8 {dimension_numbers = #tpu.dot_dimension_numbers<[1], [0], [0], [1], [0, 0, 1, 1], [], []>} : vector<8x8xf32>, vector<8x256xf32>, vector<8x256xf32> -> vector<8x256xf32>
    %c2 = arith.constant 2 : index
    %c0_9 = arith.constant 0 : index
    %c0_10 = arith.constant 0 : index
    %11 = vector.load %arg2[%c2, %c0_9, %c0_10] : memref<4x8x8xf32, #tpu.memory_space<vmem>>, vector<1x8x8xf32>
    %12 = vector.shape_cast %11 : vector<1x8x8xf32> to vector<8x8xf32>
    %cst_11 = arith.constant dense<0.000000e+00> : vector<8x256xf32>
    %13 = tpu.matmul %12, %4, %cst_11 {dimension_numbers = #tpu.dot_dimension_numbers<[1], [0], [0], [1], [0, 0, 1, 1], [], []>} : vector<8x8xf32>, vector<8x256xf32>, vector<8x256xf32> -> vector<8x256xf32>
    %c3 = arith.constant 3 : index
    %c0_12 = arith.constant 0 : index
    %c0_13 = arith.constant 0 : index
    %14 = vector.load %arg2[%c3, %c0_12, %c0_13] : memref<4x8x8xf32, #tpu.memory_space<vmem>>, vector<1x8x8xf32>
    %15 = vector.shape_cast %14 : vector<1x8x8xf32> to vector<8x8xf32>
    %cst_14 = arith.constant dense<0.000000e+00> : vector<8x256xf32>
    %16 = tpu.matmul %15, %4, %cst_14 {dimension_numbers = #tpu.dot_dimension_numbers<[1], [0], [0], [1], [0, 0, 1, 1], [], []>} : vector<8x8xf32>, vector<8x256xf32>, vector<8x256xf32> -> vector<8x256xf32>
    %17 = tpu.iota {dimensions = array<i32: 1>} : vector<8x256xi32>
    %c16_i32 = arith.constant 16 : i32
    %c0_i32_15 = arith.constant 0 : i32
    %18 = arith.cmpi eq, %c16_i32, %c0_i32_15 : i32
    %c1_i32 = arith.constant 1 : i32
    %19 = arith.select %18, %c1_i32, %c16_i32 : i32
    %20 = vector.broadcast %19 : i32 to vector<8x256xi32>
    %21 = arith.remsi %17, %20 : vector<8x256xi32>
    %c0_i32_16 = arith.constant 0 : i32
    %22 = vector.broadcast %c0_i32_16 : i32 to vector<8x256xi32>
    %23 = arith.cmpi ne, %21, %22 : vector<8x256xi32>
    %c0_i32_17 = arith.constant 0 : i32
    %24 = vector.broadcast %c0_i32_17 : i32 to vector<8x256xi32>
    %25 = arith.cmpi slt, %21, %24 : vector<8x256xi32>
    %c0_i32_18 = arith.constant 0 : i32
    %26 = arith.cmpi slt, %19, %c0_i32_18 : i32
    %27 = vector.broadcast %26 : i1 to vector<8x256xi1>
    %28 = vector.broadcast %27 : vector<8x256xi1> to vector<8x256xi1>
    %29 = arith.xori %25, %28 : vector<8x256xi1>
    %30 = arith.andi %29, %23 : vector<8x256xi1>
    %31 = vector.broadcast %19 : i32 to vector<8x256xi32>
    %32 = arith.addi %21, %31 : vector<8x256xi32>
    %33 = arith.select %30, %32, %21 : vector<8x256xi1>, vector<8x256xi32>
    %c0_i32_19 = arith.constant 0 : i32
    %34 = vector.broadcast %c0_i32_19 : i32 to vector<8x256xi32>
    %35 = arith.cmpi ne, %33, %34 : vector<8x256xi32>
    %c1_i32_20 = arith.constant 1 : i32
    %36 = tpu.dynamic_rotate %7 by %c1_i32_20 dim 1 : vector<8x256xf32>, i32 -> vector<8x256xf32>
    %cst_21 = arith.constant 0.000000e+00 : f32
    %37 = vector.broadcast %cst_21 : f32 to vector<8x256xf32>
    %38 = arith.select %35, %36, %37 : vector<8x256xi1>, vector<8x256xf32>
    %39 = arith.addf %38, %10 : vector<8x256xf32>
    %c1_i32_22 = arith.constant 1 : i32
    %40 = tpu.dynamic_rotate %13 by %c1_i32_22 dim 1 : vector<8x256xf32>, i32 -> vector<8x256xf32>
    %cst_23 = arith.constant 0.000000e+00 : f32
    %41 = vector.broadcast %cst_23 : f32 to vector<8x256xf32>
    %42 = arith.select %35, %40, %41 : vector<8x256xi1>, vector<8x256xf32>
    %43 = arith.addf %42, %16 : vector<8x256xf32>
    %c16_i32_24 = arith.constant 16 : i32
    %44 = tpu.dynamic_rotate %39 by %c16_i32_24 dim 1 : vector<8x256xf32>, i32 -> vector<8x256xf32>
    %c0_25 = arith.constant 0 : index
    %c0_26 = arith.constant 0 : index
    %45 = vector.load %arg3[%c0_25, %c0_26] : memref<8x1xf32, #tpu.memory_space<vmem>>, vector<8x1xf32>
    %46 = arith.addf %43, %44 : vector<8x256xf32>
    %47 = vector.broadcast %45 : vector<8x1xf32> to vector<8x256xf32>
    %48 = arith.addf %46, %47 : vector<8x256xf32>
    %c0_27 = arith.constant 0 : index
    %c0_28 = arith.constant 0 : index
    %c0_29 = arith.constant 0 : index
    %49 = vector.load %arg5[%c0_27, %c0_28, %c0_29] : memref<1x8x256xf32, #tpu.memory_space<vmem>>, vector<1x8x256xf32>
    %50 = vector.shape_cast %49 : vector<1x8x256xf32> to vector<8x256xf32>
    %51 = vector.shape_cast %48 : vector<8x256xf32> to vector<1x8x256xf32>
    tpu.vector_store %arg5[%c0_27, %c0_28, %c0_29], %51 {strides = array<i32>} : memref<1x8x256xf32, #tpu.memory_space<vmem>>, vector<1x8x256xf32>,
    %52 = vector.extract_strided_slice %43 {offsets = [0, 0], sizes = [8, 16], strides = [1, 1]} : vector<8x256xf32> to vector<8x16xf32>
    %c0_30 = arith.constant 0 : index
    %c0_31 = arith.constant 0 : index
    %53 = vector.load %arg6[%c0_30, %c0_31] : memref<8x16xf32, #tpu.memory_space<vmem>>, vector<8x16xf32>
    %54 = arith.addf %52, %53 : vector<8x16xf32>
    %55 = vector.broadcast %45 : vector<8x1xf32> to vector<8x16xf32>
    %56 = arith.addf %54, %55 : vector<8x16xf32>
    %c0_32 = arith.constant 0 : index
    %c0_33 = arith.constant 0 : index
    %c0_34 = arith.constant 0 : index
    %57 = vector.load %arg5[%c0_32, %c0_33, %c0_34] : memref<1x8x256xf32, #tpu.memory_space<vmem>>, vector<1x8x16xf32>
    %58 = vector.shape_cast %57 : vector<1x8x16xf32> to vector<8x16xf32>
    %59 = vector.shape_cast %56 : vector<8x16xf32> to vector<1x8x16xf32>
    tpu.vector_store %arg5[%c0_32, %c0_33, %c0_34], %59 {strides = array<i32>} : memref<1x8x256xf32, #tpu.memory_space<vmem>>, vector<1x8x16xf32>,
    %60 = vector.extract_strided_slice %39 {offsets = [0, 240], sizes = [8, 16], strides = [1, 1]} : vector<8x256xf32> to vector<8x16xf32>
    %c0_35 = arith.constant 0 : index
    %c0_36 = arith.constant 0 : index
    %61 = vector.load %arg6[%c0_35, %c0_36] : memref<8x16xf32, #tpu.memory_space<vmem>>, vector<8x16xf32>
    tpu.vector_store %arg6[%c0_35, %c0_36], %60 {strides = array<i32>} : memref<8x16xf32, #tpu.memory_space<vmem>>, vector<8x16xf32>,
    return
  }
  func.func @transform_0(%arg0: i32, %arg1: i32) -> (i32, i32, i32) {
    %c0_i32 = arith.constant 0 : i32
    %c0_i32_0 = arith.constant 0 : i32
    %c0_i32_1 = arith.constant 0 : i32
    %c0_i32_2 = arith.constant 0 : i32
    return %c0_i32, %c0_i32_0, %c0_i32_1 : i32, i32, i32
  }
  func.func @transform_1(%arg0: i32, %arg1: i32) -> (i32, i32) {
    %c0_i32 = arith.constant 0 : i32
    %c0_i32_0 = arith.constant 0 : i32
    %c0_i32_1 = arith.constant 0 : i32
    return %c0_i32, %c0_i32_0 : i32, i32
  }
  func.func @transform_2(%arg0: i32, %arg1: i32) -> (i32, i32, i32) {
    %c0_i32 = arith.constant 0 : i32
    %c0_i32_0 = arith.constant 0 : i32
    return %arg0, %c0_i32, %arg1 : i32, i32, i32
  }
  func.func @transform_3(%arg0: i32, %arg1: i32) -> (i32, i32, i32) {
    %c0_i32 = arith.constant 0 : i32
    %c0_i32_0 = arith.constant 0 : i32
    return %arg0, %c0_i32, %arg1 : i32, i32, i32
  }
}

</mosaic_0001>

<llo_original>
// kernel: tpu_custom_call.1
$region0: #{tpu_custom_call.1}
  #allocation0 [shape = 'u32[]', space=smem, size = 0x4, offset = 0x4, fixed_abs, tag = 'smem constant byte address 0x4 - core index']
  #allocation1 [shape = 'u32[72,128]{1,0:T(1,128)}', space=vmem, size = 0x9000, scoped, tag = 'internal scratch']
  #allocation2 [shape = 'f32[8,16]{1,0:T(8,128)}', space=vmem, size = 0x1000, scoped, tag = 'scratch operand']
  %s0 = inlined_call_operand.hbm [shape: f32[4,8,8], index: 0, kind: input, shape index: {}]
  %s1 = inlined_call_operand.vmem [shape: f32[8,1], index: 1, kind: input, shape index: {}]
  %s2 = inlined_call_operand.hbm [shape: f32[2,8,256], index: 2, kind: input, shape index: {}]
  %s3 = inlined_call_operand.hbm [shape: f32[2,8,256], index: 3, kind: output, shape index: {}]
  %s4 = sld [smem:[#allocation0]]
  $region57: #{tpu_custom_call.1} parent=0
    _
  %s6 = ssub.s32 1, %s4
  %s7 = scalar_select 0, %s6, %s4
  $region1: #{tpu_custom_call.1} parent=0
    #allocation3 [shape = 'u8[16384]{0}', space=vmem, size = 0x4000, scoped, tag = 'input window, operand 0, single buffered']
    #allocation4 [shape = 's32[2]{0}', space=sflag, size = 0x8, scoped, tag = 'scoped memory for tpu_custom_call.1']
    #allocation5 [shape = 's32[2]{0}', space=sflag, size = 0x8, scoped, tag = 'scoped memory for tpu_custom_call.1']
    #allocation6 [shape = 'u8[16384]{0}', space=vmem, size = 0x4000, scoped, tag = 'input window, operand 2']
    #allocation7 [shape = 's32[2]{0}', space=sflag, size = 0x8, scoped, tag = 'scoped memory for tpu_custom_call.1']
    #allocation8 [shape = 'u8[16384]{0}', space=vmem, size = 0x4000, scoped, tag = 'output window, operand 0']
    %8 = vsyncpa [#allocation4], 0
    %9 = vsyncpa [#allocation7], 0
    %s10 = scalar_lea.sflag [#allocation7], 1
    %11 = vsyncpa %s10, 0
    %12 = vsyncpa [#allocation5], 0
    %s13 = scalar_lea.sflag [#allocation5], 1
    %14 = vsyncpa %s13, 0
    loop: start=0, step=1, limit=4
    $region2: #{tpu_custom_call.1} parent=1 // loop_pre_header
      _
    $region3: #{tpu_custom_call.1} parent=1 // loop_header
      %s16 = sphi 0, %s20
      %p17 = scmp.ge.s32.totalorder %s16, 4
      %s23 = sphi 0, %s35
      %s24 = sphi 0, %s31
      %s25 = sphi 0, %s23
      %s26 = sphi 0, %s24
      %s27 = sphi 0, %s25
      %s28 = sphi 0, %s26
      %s36 = sphi 0, %s36
      %s38 = sphi 0, %s36
      %s39 = sphi 0, %s38
      %s53 = sphi 0, %s39
      %s57 = sphi 0, %s57
      %s59 = sphi 0, %s57
      %s60 = sphi 0, %s59
      %s74 = sphi 0, %s60
      %s82 = sphi 0, %s84
      %s85 = sphi 0, %s82
      %s86 = sphi 0, %s85
      %s102 = sphi 0, %s86
      %s110 = sphi 0, %s112
      %s113 = sphi 0, %s110
      %s114 = sphi 0, %s113
      %s130 = sphi 0, %s114
    $region4: #{tpu_custom_call.1} parent=1 // loop_header_branch
      %19 = sbr.rel (%p17) target = $region8
    $region5: #{tpu_custom_call.1} parent=1 // loop_body
      %s21 = ssub.s32 %s16, 1
      %s22 = ssub.s32 %s16, 2
      %s29 = sadd.s32 1, %s24
      %p30 = scmp.ge.s32.totalorder %s29, 1
      %s31 = scalar_select %p30, 0, %s29
      %s32 = sadd.s32 1, %s23
      %s33 = scalar_select %p30, %s32, %s23
      %p34 = scmp.ge.s32.totalorder %s33, 2
      %s35 = scalar_select %p34, 0, %s33
      %s37 = sadd.s32 %s36, 1
      %p40 = scmp.eq.s32.totalorder %s16, 1
      %p41 = scmp.ne.s32.totalorder %s36, %s38
      %p42 = scmp.eq.s32.totalorder %s16, 0
      %p43 = por %p41, %p42
      %p44 = scmp.ne.s32.totalorder %s36, %s38
      %p45 = scmp.eq.s32.totalorder %s21, 1
      %p46 = por %p44, %p45
      %p47 = scmp.ne.s32.totalorder %s38, %s39
      %p48 = scmp.eq.s32.totalorder %s21, 0
      %p49 = por %p47, %p48
      %p50 = scmp.ne.s32.totalorder %s38, %s39
      %p51 = scmp.eq.s32.totalorder %s22, 1
      %p52 = por %p50, %p51
      %p54 = scmp.ne.s32.totalorder %s39, %s53
      %p55 = scmp.eq.s32.totalorder %s22, 0
      %p56 = por %p54, %p55
      %s58 = sadd.s32 %s57, 1
      %p61 = scmp.eq.s32.totalorder %s16, 1
      %p62 = scmp.ne.s32.totalorder %s57, %s59
      %p63 = scmp.eq.s32.totalorder %s16, 0
      %p64 = por %p62, %p63
      %p65 = scmp.ne.s32.totalorder %s57, %s59
      %p66 = scmp.eq.s32.totalorder %s21, 1
      %p67 = por %p65, %p66
      %p68 = scmp.ne.s32.totalorder %s59, %s60
      %p69 = scmp.eq.s32.totalorder %s21, 0
      %p70 = por %p68, %p69
      %p71 = scmp.ne.s32.totalorder %s59, %s60
      %p72 = scmp.eq.s32.totalorder %s22, 1
      %p73 = por %p71, %p72
      %p75 = scmp.ne.s32.totalorder %s60, %s74
      %p76 = scmp.eq.s32.totalorder %s22, 0
      %p77 = por %p75, %p76
      %s78 = ssub.s32 %s23, %s35
      %s79 = ssub.s32 %s24, %s31
      %s80 = sor.u32 %s78, %s79
      %p81 = scmp.eq.s32.totalorder %s80, 0
      %s83 = sadd.s32 %s82, 1
      %s84 = scalar_select %p81, %s82, %s83
      %p87 = pneg %p81
      %p88 = scmp.eq.s32.totalorder %s16, 1
      %p89 = por %p87, %p88
      %p90 = scmp.ne.s32.totalorder %s82, %s85
      %p91 = scmp.eq.s32.totalorder %s16, 0
      %p92 = por %p90, %p91
      %p93 = scmp.ne.s32.totalorder %s82, %s85
      %p94 = scmp.eq.s32.totalorder %s21, 1
      %p95 = por %p93, %p94
      %p96 = scmp.ne.s32.totalorder %s85, %s86
      %p97 = scmp.eq.s32.totalorder %s21, 0
      %p98 = por %p96, %p97
      %p99 = scmp.ne.s32.totalorder %s85, %s86
      %p100 = scmp.eq.s32.totalorder %s22, 1
      %p101 = por %p99, %p100
      %p103 = scmp.ne.s32.totalorder %s86, %s102
      %p104 = scmp.eq.s32.totalorder %s22, 0
      %p105 = por %p103, %p104
      %s106 = ssub.s32 %s23, %s35
      %s107 = ssub.s32 %s24, %s31
      %s108 = sor.u32 %s106, %s107
      %p109 = scmp.eq.s32.totalorder %s108, 0
      %s111 = sadd.s32 %s110, 1
      %s112 = scalar_select %p109, %s110, %s111
      %p115 = pneg %p109
      %p116 = scmp.eq.s32.totalorder %s16, 1
      %p117 = por %p115, %p116
      %p118 = scmp.ne.s32.totalorder %s110, %s113
      %p119 = scmp.eq.s32.totalorder %s16, 0
      %p120 = por %p118, %p119
      %p121 = scmp.ne.s32.totalorder %s110, %s113
      %p122 = scmp.eq.s32.totalorder %s21, 1
      %p123 = por %p121, %p122
      %p124 = scmp.ne.s32.totalorder %s113, %s114
      %p125 = scmp.eq.s32.totalorder %s21, 0
      %p126 = por %p124, %p125
      %p127 = scmp.ne.s32.totalorder %s113, %s114
      %p128 = scmp.eq.s32.totalorder %s22, 1
      %p129 = por %p127, %p128
      %p131 = scmp.ne.s32.totalorder %s114, %s130
      %p132 = scmp.eq.s32.totalorder %s22, 0
      %p133 = por %p131, %p132
      %p134 = scmp.le.s32.totalorder 1, %s16
      %p135 = scmp.lt.s32.totalorder %s16, 3
      %p136 = pnand %p134, %p135
      %p137 = pneg %p136
      // Predicated region
      $region9: #{tpu_custom_call.1} parent=5 // pred_check
        _
      $region10: #{tpu_custom_call.1} parent=5 // pred_check_branch
        %139 = sbr.rel (%p136) target = $region12
      $region11: #{tpu_custom_call.1} parent=5 // pred_region
        %s140 = ssub.s32 %s16, 1
        // Predicated region
        $region13: #{tpu_custom_call.1} parent=11 // pred_check
          %p141 = pneg %p49
        $region14: #{tpu_custom_call.1} parent=11 // pred_check_branch
          %143 = sbr.rel (%p141) target = $region16
        $region15: #{tpu_custom_call.1} parent=11 // pred_region
          %145 = vsyncadd [#allocation4], 0
          %s146 = sshll.u32 %s0, 4
          %s147 = int_to_ptr.hbm [resolvable:$true] %s146
          %s148 = sshll.u32 [#allocation3], 4
          %s149 = int_to_ptr.vmem [resolvable:$true] %s148
          %154 = dma.hbm_to_vmem [thread:$0]  %s147, 512, %s149, [#allocation4], 128, 128, 8
        $region16: #{tpu_custom_call.1} parent=11 // pred_fallthru
          _
        // Predicated region
        $region17: #{tpu_custom_call.1} parent=11 // pred_check
          %p155 = pneg %p70
        $region18: #{tpu_custom_call.1} parent=11 // pred_check_branch
          %157 = sbr.rel (%p155) target = $region20
        $region19: #{tpu_custom_call.1} parent=11 // pred_region
          _
        $region20: #{tpu_custom_call.1} parent=11 // pred_fallthru
          _
      $region12: #{tpu_custom_call.1} parent=5 // pred_fallthru
        _
      %p158 = scmp.lt.s32.totalorder %s16, 2
      // Predicated region
      $region21: #{tpu_custom_call.1} parent=5 // pred_check
        %p159 = pneg %p158
      $region22: #{tpu_custom_call.1} parent=5 // pred_check_branch
        %161 = sbr.rel (%p159) target = $region24
      $region23: #{tpu_custom_call.1} parent=5 // pred_region
        // Predicated region
        $region25: #{tpu_custom_call.1} parent=23 // pred_check
          %p162 = pneg %p92
        $region26: #{tpu_custom_call.1} parent=23 // pred_check_branch
          %164 = sbr.rel (%p162) target = $region28
        $region27: #{tpu_custom_call.1} parent=23 // pred_region
          %s165 = sand.u32 %s82, 1
          %s166 = scalar_lea.sflag [#allocation7], %s165
          %s167 = sand.u32 %s82, 1
          %s168 = smul.addr %s167, 16
          %s169 = scalar_lea.vmem [#allocation6], %s168
          %s170 = smul.u32 2, %s24
          %172 = vsyncadd %s166, 0
          %s173 = smul.addr %s23, 2
          %s174 = sadd.s32 %s170, %s173
          %s175 = smul.addr %s174, 8
          %s176 = scalar_lea.hbm %s2, %s175
          %s178 = sshll.u32 %s176, 4
          %s179 = int_to_ptr.hbm [resolvable:$true] %s178
          %s180 = sshll.u32 %s169, 4
          %s181 = int_to_ptr.vmem [resolvable:$true] %s180
          %183 = dma.hbm_to_vmem [thread:$0]  %s179, 256, %s181, %s166
        $region28: #{tpu_custom_call.1} parent=23 // pred_fallthru
          _
      $region24: #{tpu_custom_call.1} parent=5 // pred_fallthru
        _
      %p184 = scmp.le.s32.totalorder 1, %s16
      %p185 = scmp.lt.s32.totalorder %s16, 3
      %p186 = pnand %p184, %p185
      %p187 = pneg %p186
      // Predicated region
      $region29: #{tpu_custom_call.1} parent=5 // pred_check
        _
      $region30: #{tpu_custom_call.1} parent=5 // pred_check_branch
        %189 = sbr.rel (%p186) target = $region32
      $region31: #{tpu_custom_call.1} parent=5 // pred_region
        %s190 = ssub.s32 %s16, 1
        // Predicated region
        $region33: #{tpu_custom_call.1} parent=31 // pred_check
          %p191 = pneg %p49
        $region34: #{tpu_custom_call.1} parent=31 // pred_check_branch
          %193 = sbr.rel (%p191) target = $region36
        $region35: #{tpu_custom_call.1} parent=31 // pred_region
          %195 = dma.done [#allocation4], 512
        $region36: #{tpu_custom_call.1} parent=31 // pred_fallthru
          _
        %s196 = sand.u32 %s85, 1
        %s197 = scalar_lea.sflag [#allocation7], %s196
        %s198 = sand.u32 %s85, 1
        %s199 = smul.addr %s198, 16
        %s200 = scalar_lea.vmem [#allocation6], %s199
        // Predicated region
        $region37: #{tpu_custom_call.1} parent=31 // pred_check
          %p201 = pneg %p98
        $region38: #{tpu_custom_call.1} parent=31 // pred_check_branch
          %203 = sbr.rel (%p201) target = $region40
        $region39: #{tpu_custom_call.1} parent=31 // pred_region
          %205 = dma.done %s197, 256
        $region40: #{tpu_custom_call.1} parent=31 // pred_fallthru
          _
        %p206 = pneg %p49
        %p207 = pneg %p46
        %p208 = pneg %p70
        %p209 = pneg %p67
        %s210 = sand.u32 %s85, 1
        %s211 = scalar_lea.sflag [#allocation7], %s210
        %s212 = sand.u32 %s85, 1
        %s213 = smul.addr %s212, 16
        %s214 = scalar_lea.vmem [#allocation6], %s213
        %p215 = pneg %p98
        %p216 = pneg %p95
        %p217 = pneg %p126
        %p218 = pneg %p123
        %s219 = sand.u32 %s113, 1
        %s220 = scalar_lea.sflag [#allocation5], %s219
        %s221 = sand.u32 %s113, 1
        %s222 = smul.addr %s221, 16
        %s223 = scalar_lea.vmem [#allocation8], %s222
        %s224 = smul.u32 2, %s26
        %s225 = smul.u32 2, %s26
        %p226 = scmp.eq.s32.totalorder %s26, 0
        // Predicated region
        $region41: #{tpu_custom_call.1} parent=31 // pred_check
          %p227 = pneg %p226
        $region42: #{tpu_custom_call.1} parent=31 // pred_check_branch
          %229 = sbr.rel (%p227) target = $region44
        $region43: #{tpu_custom_call.1} parent=31 // pred_region
          %vm230 = vcmask 130048
          %231 = vst.msk [vmem:[#allocation2] sm:$0xff] %vm230, 0.0
        $region44: #{tpu_custom_call.1} parent=31 // pred_fallthru
          _
        %v232 = vld [vmem:[%s200] sm:$0xff]
        %v233 = vld [vmem:[%s200 + $0x8] sm:$0xff]
        %v234 = vld [vmem:[#allocation3] sm:$0xff]
        %vm235 = vcmask 64512
        %v237 = vsel %vm235, %v234, 0
        %239 = vmatpush.msra.mxu0 0.0
        %240 = vmatpush.msra.mxu0 0.0
        %241 = vmatpush.msra.mxu0 0.0
        %242 = vmatpush.msra.mxu0 0.0
        %243 = vmatpush.msra.mxu0 0.0
        %244 = vmatpush.msra.mxu0 0.0
        %245 = vmatpush.msra.mxu0 0.0
        %246 = vmatpush.msra.mxu0 0.0
        %247 = vmatpush.msra.mxu0 0.0
        %248 = vmatpush.msra.mxu0 0.0
        %249 = vmatpush.msra.mxu0 0.0
        %250 = vmatpush.msra.mxu0 0.0
        %251 = vmatpush.msra.mxu0 0.0
        %252 = vmatpush.msra.mxu0 0.0
        %253 = vmatpush.msra.mxu0 0.0
        %254 = vmatpush.msra.mxu0 %v232
        %255 = vmatmul.f32.gmra.mxu0 %v237
        %v256 = vpop.f32.mrf.mxu0
        %v257 = vadd.f32 0.0, %v256
        %258 = vdwg.mxu0
        %259 = vmatpush.msra.mxu0 0.0
        %260 = vmatpush.msra.mxu0 0.0
        %261 = vmatpush.msra.mxu0 0.0
        %262 = vmatpush.msra.mxu0 0.0
        %263 = vmatpush.msra.mxu0 0.0
        %264 = vmatpush.msra.mxu0 0.0
        %265 = vmatpush.msra.mxu0 0.0
        %266 = vmatpush.msra.mxu0 0.0
        %267 = vmatpush.msra.mxu0 0.0
        %268 = vmatpush.msra.mxu0 0.0
        %269 = vmatpush.msra.mxu0 0.0
        %270 = vmatpush.msra.mxu0 0.0
        %271 = vmatpush.msra.mxu0 0.0
        %272 = vmatpush.msra.mxu0 0.0
        %273 = vmatpush.msra.mxu0 0.0
        %274 = vmatpush.msra.mxu0 %v233
        %275 = vmatmul.f32.gmra.mxu0 %v237
        %v276 = vpop.f32.mrf.mxu0
        %v277 = vadd.f32 0.0, %v276
        %278 = vdwg.mxu0
        %s279 = scalar_lea.vmem [#allocation3], 8
        %v280 = vld [vmem:[%s279] sm:$0xff]
        %v282 = vsel %vm235, %v280, 0
        %284 = vmatpush.msra.mxu0 0.0
        %285 = vmatpush.msra.mxu0 0.0
        %286 = vmatpush.msra.mxu0 0.0
        %287 = vmatpush.msra.mxu0 0.0
        %288 = vmatpush.msra.mxu0 0.0
        %289 = vmatpush.msra.mxu0 0.0
        %290 = vmatpush.msra.mxu0 0.0
        %291 = vmatpush.msra.mxu0 0.0
        %292 = vmatpush.msra.mxu0 0.0
        %293 = vmatpush.msra.mxu0 0.0
        %294 = vmatpush.msra.mxu0 0.0
        %295 = vmatpush.msra.mxu0 0.0
        %296 = vmatpush.msra.mxu0 0.0
        %297 = vmatpush.msra.mxu0 0.0
        %298 = vmatpush.msra.mxu0 0.0
        %299 = vmatpush.msra.mxu0 %v232
        %300 = vmatmul.f32.gmra.mxu0 %v282
        %v301 = vpop.f32.mrf.mxu0
        %v302 = vadd.f32 0.0, %v301
        %303 = vdwg.mxu0
        %304 = vmatpush.msra.mxu0 0.0
        %305 = vmatpush.msra.mxu0 0.0
        %306 = vmatpush.msra.mxu0 0.0
        %307 = vmatpush.msra.mxu0 0.0
        %308 = vmatpush.msra.mxu0 0.0
        %309 = vmatpush.msra.mxu0 0.0
        %310 = vmatpush.msra.mxu0 0.0
        %311 = vmatpush.msra.mxu0 0.0
        %312 = vmatpush.msra.mxu0 0.0
        %313 = vmatpush.msra.mxu0 0.0
        %314 = vmatpush.msra.mxu0 0.0
        %315 = vmatpush.msra.mxu0 0.0
        %316 = vmatpush.msra.mxu0 0.0
        %317 = vmatpush.msra.mxu0 0.0
        %318 = vmatpush.msra.mxu0 0.0
        %319 = vmatpush.msra.mxu0 %v233
        %320 = vmatmul.f32.gmra.mxu0 %v282
        %v321 = vpop.f32.mrf.mxu0
        %v322 = vadd.f32 0.0, %v321
        %323 = vdwg.mxu0
        %s324 = scalar_lea.vmem [#allocation3], 16
        %v325 = vld [vmem:[%s324] sm:$0xff]
        %v327 = vsel %vm235, %v325, 0
        %329 = vmatpush.msra.mxu0 0.0
        %330 = vmatpush.msra.mxu0 0.0
        %331 = vmatpush.msra.mxu0 0.0
        %332 = vmatpush.msra.mxu0 0.0
        %333 = vmatpush.msra.mxu0 0.0
        %334 = vmatpush.msra.mxu0 0.0
        %335 = vmatpush.msra.mxu0 0.0
        %336 = vmatpush.msra.mxu0 0.0
        %337 = vmatpush.msra.mxu0 0.0
        %338 = vmatpush.msra.mxu0 0.0
        %339 = vmatpush.msra.mxu0 0.0
        %340 = vmatpush.msra.mxu0 0.0
        %341 = vmatpush.msra.mxu0 0.0
        %342 = vmatpush.msra.mxu0 0.0
        %343 = vmatpush.msra.mxu0 0.0
        %344 = vmatpush.msra.mxu0 %v232
        %345 = vmatmul.f32.gmra.mxu0 %v327
        %v346 = vpop.f32.mrf.mxu0
        %v347 = vadd.f32 0.0, %v346
        %348 = vdwg.mxu0
        %349 = vmatpush.msra.mxu0 0.0
        %350 = vmatpush.msra.mxu0 0.0
        %351 = vmatpush.msra.mxu0 0.0
        %352 = vmatpush.msra.mxu0 0.0
        %353 = vmatpush.msra.mxu0 0.0
        %354 = vmatpush.msra.mxu0 0.0
        %355 = vmatpush.msra.mxu0 0.0
        %356 = vmatpush.msra.mxu0 0.0
        %357 = vmatpush.msra.mxu0 0.0
        %358 = vmatpush.msra.mxu0 0.0
        %359 = vmatpush.msra.mxu0 0.0
        %360 = vmatpush.msra.mxu0 0.0
        %361 = vmatpush.msra.mxu0 0.0
        %362 = vmatpush.msra.mxu0 0.0
        %363 = vmatpush.msra.mxu0 0.0
        %364 = vmatpush.msra.mxu0 %v233
        %365 = vmatmul.f32.gmra.mxu0 %v327
        %v366 = vpop.f32.mrf.mxu0
        %v367 = vadd.f32 0.0, %v366
        %368 = vdwg.mxu0
        %s369 = scalar_lea.vmem [#allocation3], 24
        %v370 = vld [vmem:[%s369] sm:$0xff]
        %v372 = vsel %vm235, %v370, 0
        %374 = vmatpush.msra.mxu0 0.0
        %375 = vmatpush.msra.mxu0 0.0
        %376 = vmatpush.msra.mxu0 0.0
        %377 = vmatpush.msra.mxu0 0.0
        %378 = vmatpush.msra.mxu0 0.0
        %379 = vmatpush.msra.mxu0 0.0
        %380 = vmatpush.msra.mxu0 0.0
        %381 = vmatpush.msra.mxu0 0.0
        %382 = vmatpush.msra.mxu0 0.0
        %383 = vmatpush.msra.mxu0 0.0
        %384 = vmatpush.msra.mxu0 0.0
        %385 = vmatpush.msra.mxu0 0.0
        %386 = vmatpush.msra.mxu0 0.0
        %387 = vmatpush.msra.mxu0 0.0
        %388 = vmatpush.msra.mxu0 0.0
        %389 = vmatpush.msra.mxu0 %v232
        %390 = vmatmul.f32.gmra.mxu0 %v372
        %v391 = vpop.f32.mrf.mxu0
        %v392 = vadd.f32 0.0, %v391
        %393 = vdwg.mxu0
        %394 = vmatpush.msra.mxu0 0.0
        %395 = vmatpush.msra.mxu0 0.0
        %396 = vmatpush.msra.mxu0 0.0
        %397 = vmatpush.msra.mxu0 0.0
        %398 = vmatpush.msra.mxu0 0.0
        %399 = vmatpush.msra.mxu0 0.0
        %400 = vmatpush.msra.mxu0 0.0
        %401 = vmatpush.msra.mxu0 0.0
        %402 = vmatpush.msra.mxu0 0.0
        %403 = vmatpush.msra.mxu0 0.0
        %404 = vmatpush.msra.mxu0 0.0
        %405 = vmatpush.msra.mxu0 0.0
        %406 = vmatpush.msra.mxu0 0.0
        %407 = vmatpush.msra.mxu0 0.0
        %408 = vmatpush.msra.mxu0 0.0
        %409 = vmatpush.msra.mxu0 %v233
        %410 = vmatmul.f32.gmra.mxu0 %v372
        %v411 = vpop.f32.mrf.mxu0
        %v412 = vadd.f32 0.0, %v411
        %413 = vdwg.mxu0
        %v414 = vlaneseq
        %v415 = vand.u32 %v414, 127
        %v416 = vadd.s32 %v415, 128
        %vm417 = vcmp.lt.s32.totalorder %v415, 0
        %v418 = vsub.s32 0, %v415
        %v419 = vsel %vm417, %v418, %v415
        %v420 = vshrl.u32 %v419, 4
        %v421 = vand.u32 %v419, 15
        %v422 = vsub.s32 0, %v421
        %v423 = vsel %vm417, %v422, %v421
        %vm424 = vcmp.lt.s32.totalorder %v416, 0
        %v425 = vsub.s32 0, %v416
        %v426 = vsel %vm424, %v425, %v416
        %v427 = vshrl.u32 %v426, 4
        %v428 = vand.u32 %v426, 15
        %v429 = vsub.s32 0, %v428
        %v430 = vsel %vm424, %v429, %v428
        %vm431 = vcmp.ne.s32.totalorder %v423, 0
        %vm432 = vcmp.ne.s32.totalorder %v430, 0
        %vm433 = vcmp.lt.s32.totalorder %v423, 0
        %vm434 = vcmp.lt.s32.totalorder %v430, 0
        %vm435 = vmand %vm433, %vm431
        %vm436 = vmand %vm434, %vm432
        %v437 = vadd.s32 %v423, 16
        %v438 = vadd.s32 %v430, 16
        %v439 = vsel %vm435, %v437, %v423
        %v440 = vsel %vm436, %v438, %v430
        %vm441 = vcmp.ne.s32.totalorder %v439, 0
        %vm442 = vcmp.ne.s32.totalorder %v440, 0
        %443 = vrot.lane.b32.xlu0 %v257, 1
        %v444 = vpop.permute.xlu0 %443
        %445 = vrot.lane.b32.xlu0 %v277, 1
        %v446 = vpop.permute.xlu0 %445
        %vm447 = vcmp.lt.s32.totalorder %v415, 1
        %v448 = vsel %vm447, %v444, %v446
        %v449 = vsel %vm447, %v446, %v444
        %v450 = vsel %vm441, %v449, 0.0
        %v451 = vsel %vm442, %v448, 0.0
        %v452 = vadd.f32 %v450, %v302
        %v453 = vadd.f32 %v451, %v322
        %454 = vrot.lane.b32.xlu0 %v347, 1
        %v455 = vpop.permute.xlu0 %454
        %456 = vrot.lane.b32.xlu0 %v367, 1
        %v457 = vpop.permute.xlu0 %456
        %v458 = vsel %vm447, %v455, %v457
        %v459 = vsel %vm447, %v457, %v455
        %v460 = vsel %vm441, %v459, 0.0
        %v461 = vsel %vm442, %v458, 0.0
        %v462 = vadd.f32 %v460, %v392
        %v463 = vadd.f32 %v461, %v412
        %464 = vrot.lane.b32.xlu0 %v452, 16
        %v465 = vpop.permute.xlu0 %464
        %466 = vrot.lane.b32.xlu0 %v453, 16
        %v467 = vpop.permute.xlu0 %466
        %vm468 = vcmp.lt.s32.totalorder %v415, 16
        %v469 = vsel %vm468, %v465, %v467
        %v470 = vsel %vm468, %v467, %v465
        %v471 = vld [vmem:[%s1] sm:$0xff]
        %v472 = vadd.f32 %v462, %v470
        %v473 = vadd.f32 %v463, %v469
        %475 = vset.pattern.permute.xlu0 0
        %476 = vperm.xlu0 %475, %v471
        %v477 = vpop.permute.xlu0 %476
        %v479 = vadd.f32 %v472, %v477
        %v480 = vadd.f32 %v473, %v477
        %481 = vst [vmem:[%s223] sm:$0xff] %v479
        %482 = vst [vmem:[%s223 + $0x8] sm:$0xff] %v480
        %v483 = vld [vmem:[#allocation2] sm:$0xff]
        %v484 = vadd.f32 %v462, %v483
        %v485 = vadd.f32 %v484, %v477
        %vm486 = vcmask 130048
        %487 = vst.msk [vmem:[%s223] sm:$0xff] %vm486, %v485
        %489 = vrot.lane.b32.xlu0 %v453, 16
        %v490 = vpop.permute.xlu0 %489
        %492 = vst.msk [vmem:[#allocation2] sm:$0xff] %vm486, %v490
        %s493 = sand.u32 %s113, 1
        %s494 = scalar_lea.sflag [#allocation5], %s493
        %s495 = sand.u32 %s113, 1
        %s496 = smul.addr %s495, 16
        %s497 = scalar_lea.vmem [#allocation8], %s496
        // Predicated region
        $region45: #{tpu_custom_call.1} parent=31 // pred_check
          %p498 = pneg %p123
        $region46: #{tpu_custom_call.1} parent=31 // pred_check_branch
          %500 = sbr.rel (%p498) target = $region48
        $region47: #{tpu_custom_call.1} parent=31 // pred_region
          %s501 = smul.u32 2, %s26
          %503 = vsyncadd %s494, 0
          %s504 = smul.addr %s25, 2
          %s505 = sadd.s32 %s501, %s504
          %s506 = smul.addr %s505, 8
          %s507 = scalar_lea.hbm %s3, %s506
          %s509 = sshll.u32 %s497, 4
          %s510 = int_to_ptr.vmem [resolvable:$true] %s509
          %s511 = sshll.u32 %s507, 4
          %s512 = int_to_ptr.hbm [resolvable:$true] %s511
          %514 = dma.vmem_to_hbm [thread:$0]  %s510, 256, %s512, %s494
        $region48: #{tpu_custom_call.1} parent=31 // pred_fallthru
          _
      $region32: #{tpu_custom_call.1} parent=5 // pred_fallthru
        _
      %p515 = scmp.le.s32.totalorder 2, %s16
      // Predicated region
      $region49: #{tpu_custom_call.1} parent=5 // pred_check
        %p516 = pneg %p515
      $region50: #{tpu_custom_call.1} parent=5 // pred_check_branch
        %518 = sbr.rel (%p516) target = $region52
      $region51: #{tpu_custom_call.1} parent=5 // pred_region
        %s519 = ssub.s32 %s16, 2
        // Predicated region
        $region53: #{tpu_custom_call.1} parent=51 // pred_check
          %p520 = pneg %p129
        $region54: #{tpu_custom_call.1} parent=51 // pred_check_branch
          %522 = sbr.rel (%p520) target = $region56
        $region55: #{tpu_custom_call.1} parent=51 // pred_region
          %s523 = sand.u32 %s114, 1
          %s524 = scalar_lea.sflag [#allocation5], %s523
          %s525 = sand.u32 %s114, 1
          %s526 = smul.addr %s525, 16
          %s527 = scalar_lea.vmem [#allocation8], %s526
          %529 = dma.done %s524, 256
        $region56: #{tpu_custom_call.1} parent=51 // pred_fallthru
          _
      $region52: #{tpu_custom_call.1} parent=5 // pred_fallthru
        _
    $region6: #{tpu_custom_call.1} parent=1 // loop_footer
      %s20 = sadd.s32 1, %s16
    $region7: #{tpu_custom_call.1} parent=1 // loop_footer_branch
      %15 = sbr.rel target = $region3
    $region8: #{tpu_custom_call.1} parent=1 // loop_exit
      _
    %530 = vsyncpa [#allocation4], 1
    %s531 = scalar_lea.sflag [#allocation4], 1
    %532 = vsyncpa %s531, 1
    %533 = vsyncpa [#allocation7], 1
    %s534 = scalar_lea.sflag [#allocation7], 1
    %535 = vsyncpa %s534, 1
    %536 = vsyncpa [#allocation5], 1
    %s537 = scalar_lea.sflag [#allocation5], 1
    %538 = vsyncpa %s537, 1

</llo_original>
